<compile_context>
chip_gen: v7x
topology: tpu7x:2x2x1
jax: 0.10.0
libtpu: 0.0.40
codegen_flags: <defaults>
</compile_context>

<pallas_src>
import numpy as np
import jax
import jax.numpy as jnp
from jax import lax
from jax.experimental import pallas as pl
from jax.experimental.pallas import tpu as pltpu

SIMNORM_V = 8  # group size used by TD-MPC2 SimNorm


def _dynamics_kernel(s_ref, a_ref, w1s_ref, w1a_ref, w2_ref, vec_ref, gs_ref,
                     o_ref):
    """One batch tile: 3 small MXU matmuls + LayerNorm/Mish/SimNorm epilogue."""
    eps = 1e-5

    # Packed per-feature vectors (f32): rows 0..5 = b1, g1, beta1, b2, g2, beta2.
    b1, g1, be1 = vec_ref[0:1, :], vec_ref[1:2, :], vec_ref[2:3, :]
    b2, g2, be2 = vec_ref[3:4, :], vec_ref[4:5, :], vec_ref[5:6, :]

    # ---- Layer 1: (state | action) @ W1 + b1 -> LayerNorm -> Mish ----------
    # bf16 operands, f32 accumulation on the MXU.
    h = (jnp.dot(s_ref[...], w1s_ref[...], preferred_element_type=jnp.float32)
         + jnp.dot(a_ref[...], w1a_ref[...], preferred_element_type=jnp.float32)
         + b1)
    # LayerNorm with two *independent* cross-lane reductions (E[x], E[x^2]).
    mu = jnp.mean(h, axis=-1, keepdims=True)
    ex2 = jnp.mean(h * h, axis=-1, keepdims=True)
    var = jnp.maximum(ex2 - mu * mu, 0.0)
    hn = (h - mu) * lax.rsqrt(var + eps) * g1 + be1

    # Mish(x) = x * tanh(softplus(x)) with a single exp + a single reciprocal:
    #   t = e^{-|x|}, dd = (1+t)^2, nn = (x>=0 ? t^2 : 1)
    #   tanh(softplus(x)) = (dd - nn) / (dd + nn)        (overflow-free, t<=1)
    t = jnp.exp(-jnp.abs(hn))
    n = jnp.where(hn >= 0.0, t, 1.0)
    nn = n * n
    dd = (1.0 + t) * (1.0 + t)
    denom = dd + nn                       # in [1, 5] -> well conditioned
    r = pl.reciprocal(denom, approx=True)
    r = r * (2.0 - denom * r)             # one Newton step -> ~1e-6 rel error
    hm = hn * (dd - nn) * r

    # ---- Layer 2: Linear -> LayerNorm -> SimNorm ----------------------------
    y = jnp.dot(hm.astype(jnp.bfloat16), w2_ref[...],
                preferred_element_type=jnp.float32) + b2
    mu2 = jnp.mean(y, axis=-1, keepdims=True)
    ey2 = jnp.mean(y * y, axis=-1, keepdims=True)
    var2 = jnp.maximum(ey2 - mu2 * mu2, 0.0)
    yn = (y - mu2) * lax.rsqrt(var2 + eps) * g2 + be2

    # SimNorm: softmax within contiguous groups of size V along the last dim.
    # Per-row max subtraction is constant within every group -> same softmax,
    # stable right after LayerNorm.  Group sums via a constant block-diagonal
    # f32 matmul (gs_ref); divide on the EUP with one refinement step.
    # TODO(synk): per-group max would remove the (unlikely) all-underflow case
    # for extreme trained g2/beta2; the clamp below keeps it NaN-free.
    row_max = jnp.max(yn, axis=-1, keepdims=True)
    e = jnp.exp(yn - row_max)                                          # (B, L)
    group_sum = jnp.dot(e, gs_ref[...], preferred_element_type=jnp.float32)
    group_sum = jnp.maximum(group_sum, 1e-30)
    rg = pl.reciprocal(group_sum, approx=True)
    rg = rg * (2.0 - group_sum * rg)      # Newton step
    o_ref[...] = e * rg


def pack_params(params, latent_size):
    """One-time packing of module params into Pallas-ready operands."""
    L = latent_size
    w1 = params["w1"]                                    # (L+A, L), f32
    w1s, w1a = w1[:L, :], w1[L:, :]                      # (L,L), (A,L)
    vecs = jnp.concatenate(
        [params["b1"], params["g1"], params["beta1"],
         params["b2"], params["g2"], params["beta2"],
         jnp.zeros((2, L), jnp.float32)], axis=0)        # (8, L) padded pack
    # Constant block-diagonal group-membership matrix for SimNorm group sums.
    idx = np.arange(L) // SIMNORM_V
    gs = jnp.asarray((idx[:, None] == idx[None, :]).astype(np.float32))  # (L,L)
    return {
        "w1s": w1s.astype(jnp.bfloat16),   # streamed weights in bf16
        "w1a": w1a.astype(jnp.bfloat16),
        "w2": params["w2"].astype(jnp.bfloat16),
        "vecs": vecs,                      # f32: LN scale/shift + biases
        "gs": gs,                          # f32: keeps SimNorm denom matmul f32
    }


def _choose_tiling(B, block_b):
    """Pick (tile_b, n_tiles, padded_B).

    Avoids the jnp.pad / out[:B] round-trip whenever B is a multiple of 8 (the
    common case) by choosing a tile that divides B; prefers >= 2 big tiles so
    both v7x TensorCores are used when the batch is large.
    """
    if B % 8 == 0:
        if B <= block_b:
            if B % 16 == 0 and B // 2 >= 512:
                return B // 2, 2, B          # two large tiles -> megacore
            return B, 1, B                   # small batch: one tile, no pad
        start = (min(block_b, B) // 8) * 8
        for t in range(start, 127, -8):      # largest divisor tile >= 128 rows
            if B % t == 0:
                return t, B // t, B
    # Cold fallback (ragged batch / awkward divisors): pad rows, slice after.
    t = min(block_b, max(8, -(-B // 8) * 8))
    t = max(8, (t // 8) * 8)
    n = -(-B // t)
    return t, n, n * t


def dynamics_net_forward(latent_state, latent_action, packed, *, block_b=1024):
    """Batched forward: grid over batch rows, weights resident across steps.

    For best bandwidth, callers should pass latent_state / latent_action
    already in bf16 (a wrapper-side cast is an extra HBM pass).
    """
    B, L = latent_state.shape
    A = latent_action.shape[-1]

    tile_b, n_tiles, Bp = _choose_tiling(B, block_b)

    s = latent_state if latent_state.dtype == jnp.bfloat16 \
        else latent_state.astype(jnp.bfloat16)
    a = latent_action if latent_action.dtype == jnp.bfloat16 \
        else latent_action.astype(jnp.bfloat16)
    if Bp != B:  # cold fallback only; hot path never pads
        pad = Bp - B
        s = jnp.pad(s, ((0, pad), (0, 0)))
        a = jnp.pad(a, ((0, pad), (0, 0)))

    out = pl.pallas_call(
        _dynamics_kernel,
        out_shape=jax.ShapeDtypeStruct((Bp, L), jnp.float32),
        grid=(n_tiles,),
        in_specs=[
            pl.BlockSpec((tile_b, L), lambda i: (i, 0)),      # latent_state (bf16)
            pl.BlockSpec((tile_b, A), lambda i: (i, 0)),      # latent_action (bf16)
            pl.BlockSpec((L, L), lambda i: (0, 0)),           # W1[:L]  (resident)
            pl.BlockSpec((A, L), lambda i: (0, 0)),           # W1[L:]  (resident)
            pl.BlockSpec((L, L), lambda i: (0, 0)),           # W2      (resident)
            pl.BlockSpec((8, L), lambda i: (0, 0)),           # packed LN vectors
            pl.BlockSpec((L, L), lambda i: (0, 0)),           # SimNorm group matrix
        ],
        out_specs=pl.BlockSpec((tile_b, L), lambda i: (i, 0)),
        compiler_params=pltpu.CompilerParams(
            dimension_semantics=("parallel",)),               # megacore on v7x
    )(s, a, packed["w1s"], packed["w1a"], packed["w2"],
      packed["vecs"], packed["gs"])

    return out[:B] if Bp != B else out


def init_params(latent_size, action_size, key):
    """Deterministic synthetic parameters matching the module's shapes (f32)."""
    in1 = latent_size + action_size
    k1, k2, k3, k4 = jax.random.split(key, 4)
    s1 = 1.0 / jnp.sqrt(jnp.float32(in1))
    s2 = 1.0 / jnp.sqrt(jnp.float32(latent_size))
    return {
        # Linear weights stored as (in, out) so the kernel does x @ W
        "w1": jax.random.uniform(k1, (in1, latent_size), jnp.float32, -s1, s1),
        "b1": jax.random.uniform(k2, (1, latent_size), jnp.float32, -s1, s1),
        "g1": jnp.ones((1, latent_size), jnp.float32),      # LayerNorm gamma
        "beta1": jnp.zeros((1, latent_size), jnp.float32),  # LayerNorm beta
        "w2": jax.random.uniform(k3, (latent_size, latent_size), jnp.float32, -s2, s2),
        "b2": jax.random.uniform(k4, (1, latent_size), jnp.float32, -s2, s2),
        "g2": jnp.ones((1, latent_size), jnp.float32),
        "beta2": jnp.zeros((1, latent_size), jnp.float32),
    }


def _reference_forward(latent_state, latent_action, params, *,
                       match_kernel_precision=False):
    """Pure-JAX reference.  If match_kernel_precision, round operands at the
    same points the kernel does (bf16 inputs/weights, bf16 hidden before the
    second matmul) so a tight tolerance applies."""
    eps = 1e-5
    rnd = ((lambda v: v.astype(jnp.bfloat16).astype(jnp.float32))
           if match_kernel_precision else (lambda v: v))
    x = jnp.concatenate([rnd(latent_state), rnd(latent_action)], axis=-1)
    h = x @ rnd(params["w1"]) + params["b1"]
    h = (h - h.mean(-1, keepdims=True)) / jnp.sqrt(h.var(-1, keepdims=True) + eps)
    h = h * params["g1"] + params["beta1"]
    h = h * jnp.tanh(jax.nn.softplus(h))                    # Mish
    y = rnd(h) @ rnd(params["w2"]) + params["b2"]
    y = (y - y.mean(-1, keepdims=True)) / jnp.sqrt(y.var(-1, keepdims=True) + eps)
    y = y * params["g2"] + params["beta2"]
    B, L = y.shape
    z = jax.nn.softmax(y.reshape(B, L // SIMNORM_V, SIMNORM_V), axis=-1)
    return z.reshape(B, L)


if __name__ == "__main__":
    latent_size = 64     # divisible by SimNorm group size 8
    action_size = 16
    batch = 8

    key = jax.random.PRNGKey(0)
    kp, ks, ka = jax.random.split(key, 3)
    params = init_params(latent_size, action_size, kp)
    packed = pack_params(params, latent_size)               # one-time packing

    # Caller supplies activations in bf16 (streamed tensors).
    latent_state = jax.random.normal(
        ks, (batch, latent_size), jnp.float32).astype(jnp.bfloat16)
    latent_action = jax.random.normal(
        ka, (batch, action_size), jnp.float32).astype(jnp.bfloat16)

    out = dynamics_net_forward(latent_state, latent_action, packed)
    out = jax.block_until_ready(out)
    assert out.shape == (batch, latent_size)
    assert bool(jnp.all(jnp.isfinite(out)))

    s32 = latent_state.astype(jnp.float32)
    a32 = latent_action.astype(jnp.float32)

    # Tight check vs a reference that rounds where the kernel rounds.
    ref_tight = _reference_forward(s32, a32, params, match_kernel_precision=True)
    assert jnp.allclose(out, ref_tight, atol=1e-3, rtol=1e-3), \
        "mismatch vs precision-matched reference"

    # Loose check vs pure-f32 module semantics (bf16 I/O error budget).
    ref_f32 = _reference_forward(s32, a32, params, match_kernel_precision=False)
    assert jnp.allclose(out, ref_f32, atol=2e-2, rtol=2e-2), \
        "mismatch vs f32 module reference"

    print("KERNEL_OK")
</pallas_src>

<mosaic_0001>
module attributes {stable_mosaic.version = 11 : i64} {
  func.func @_dynamics_kernel(%arg0: i32, %arg1: memref<8x64xbf16, #tpu.memory_space<vmem>>, %arg2: memref<8x16xbf16, #tpu.memory_space<vmem>>, %arg3: memref<64x64xbf16, #tpu.memory_space<vmem>>, %arg4: memref<16x64xbf16, #tpu.memory_space<vmem>>, %arg5: memref<64x64xbf16, #tpu.memory_space<vmem>>, %arg6: memref<8x64xf32, #tpu.memory_space<vmem>>, %arg7: memref<64x64xf32, #tpu.memory_space<vmem>>, %arg8: memref<8x64xf32, #tpu.memory_space<vmem>>) attributes {dimension_semantics = [#tpu.dimension_semantics<parallel>], iteration_bounds = array<i64: 1>, scalar_prefetch = 0 : i64, scratch_operands = 0 : i64, tpu.core_type = #tpu.core_type<tc>, window_params = [{transform_indices = @transform_0, window_bounds = array<i64: 8, 64>}, {transform_indices = @transform_1, window_bounds = array<i64: 8, 16>}, {pipeline_mode = #tpu.pipeline_mode<synchronous>, transform_indices = @transform_2, window_bounds = array<i64: 64, 64>}, {pipeline_mode = #tpu.pipeline_mode<synchronous>, transform_indices = @transform_3, window_bounds = array<i64: 16, 64>}, {pipeline_mode = #tpu.pipeline_mode<synchronous>, transform_indices = @transform_4, window_bounds = array<i64: 64, 64>}, {pipeline_mode = #tpu.pipeline_mode<synchronous>, transform_indices = @transform_5, window_bounds = array<i64: 8, 64>}, {pipeline_mode = #tpu.pipeline_mode<synchronous>, transform_indices = @transform_6, window_bounds = array<i64: 64, 64>}, {transform_indices = @transform_7, window_bounds = array<i64: 8, 64>}]} {
    %c0 = arith.constant 0 : index
    %c0_0 = arith.constant 0 : index
    %0 = vector.load %arg6[%c0, %c0_0] : memref<8x64xf32, #tpu.memory_space<vmem>>, vector<1x64xf32>
    %c1 = arith.constant 1 : index
    %c0_1 = arith.constant 0 : index
    %1 = vector.load %arg6[%c1, %c0_1] : memref<8x64xf32, #tpu.memory_space<vmem>>, vector<1x64xf32>
    %c2 = arith.constant 2 : index
    %c0_2 = arith.constant 0 : index
    %2 = vector.load %arg6[%c2, %c0_2] : memref<8x64xf32, #tpu.memory_space<vmem>>, vector<1x64xf32>
    %c3 = arith.constant 3 : index
    %c0_3 = arith.constant 0 : index
    %3 = vector.load %arg6[%c3, %c0_3] : memref<8x64xf32, #tpu.memory_space<vmem>>, vector<1x64xf32>
    %c4 = arith.constant 4 : index
    %c0_4 = arith.constant 0 : index
    %4 = vector.load %arg6[%c4, %c0_4] : memref<8x64xf32, #tpu.memory_space<vmem>>, vector<1x64xf32>
    %c5 = arith.constant 5 : index
    %c0_5 = arith.constant 0 : index
    %5 = vector.load %arg6[%c5, %c0_5] : memref<8x64xf32, #tpu.memory_space<vmem>>, vector<1x64xf32>
    %c0_6 = arith.constant 0 : index
    %c0_7 = arith.constant 0 : index
    %6 = vector.load %arg1[%c0_6, %c0_7] : memref<8x64xbf16, #tpu.memory_space<vmem>>, vector<8x64xbf16>
    %c0_8 = arith.constant 0 : index
    %c0_9 = arith.constant 0 : index
    %7 = vector.load %arg3[%c0_8, %c0_9] : memref<64x64xbf16, #tpu.memory_space<vmem>>, vector<64x64xbf16>
    %cst = arith.constant dense<0.000000e+00> : vector<8x64xf32>
    %8 = tpu.matmul %6, %7, %cst {dimension_numbers = #tpu.dot_dimension_numbers<[1], [0], [0], [1], [0, 0, 1, 1], [], []>} : vector<8x64xbf16>, vector<64x64xbf16>, vector<8x64xf32> -> vector<8x64xf32>
    %c0_10 = arith.constant 0 : index
    %c0_11 = arith.constant 0 : index
    %9 = vector.load %arg2[%c0_10, %c0_11] : memref<8x16xbf16, #tpu.memory_space<vmem>>, vector<8x16xbf16>
    %c0_12 = arith.constant 0 : index
    %c0_13 = arith.constant 0 : index
    %10 = vector.load %arg4[%c0_12, %c0_13] : memref<16x64xbf16, #tpu.memory_space<vmem>>, vector<16x64xbf16>
    %cst_14 = arith.constant dense<0.000000e+00> : vector<8x64xf32>
    %11 = tpu.matmul %9, %10, %cst_14 {dimension_numbers = #tpu.dot_dimension_numbers<[1], [0], [0], [1], [0, 0, 1, 1], [], []>} : vector<8x16xbf16>, vector<16x64xbf16>, vector<8x64xf32> -> vector<8x64xf32>
    %12 = arith.addf %8, %11 : vector<8x64xf32>
    %13 = vector.broadcast %0 : vector<1x64xf32> to vector<8x64xf32>
    %14 = arith.addf %12, %13 : vector<8x64xf32>
    %cst_15 = arith.constant dense<0.000000e+00> : vector<8xf32>
    %15 = vector.multi_reduction <add>, %14, %cst_15 [1] : vector<8x64xf32> to vector<8xf32>
    %16 = vector.shape_cast %15 : vector<8xf32> to vector<8x1xf32>
    %cst_16 = arith.constant 6.400000e+01 : f32
    %17 = vector.broadcast %cst_16 : f32 to vector<8x1xf32>
    %18 = arith.divf %16, %17 : vector<8x1xf32>
    %19 = arith.mulf %14, %14 : vector<8x64xf32>
    %cst_17 = arith.constant dense<0.000000e+00> : vector<8xf32>
    %20 = vector.multi_reduction <add>, %19, %cst_17 [1] : vector<8x64xf32> to vector<8xf32>
    %21 = vector.shape_cast %20 : vector<8xf32> to vector<8x1xf32>
    %cst_18 = arith.constant 6.400000e+01 : f32
    %22 = vector.broadcast %cst_18 : f32 to vector<8x1xf32>
    %23 = arith.divf %21, %22 : vector<8x1xf32>
    %24 = arith.mulf %18, %18 : vector<8x1xf32>
    %25 = arith.subf %23, %24 : vector<8x1xf32>
    %cst_19 = arith.constant 0.000000e+00 : f32
    %26 = vector.broadcast %cst_19 : f32 to vector<8x1xf32>
    %27 = arith.maximumf %25, %26 : vector<8x1xf32>
    %28 = vector.broadcast %18 : vector<8x1xf32> to vector<8x64xf32>
    %29 = arith.subf %14, %28 : vector<8x64xf32>
    %cst_20 = arith.constant 9.99999974E-6 : f32
    %30 = vector.broadcast %cst_20 : f32 to vector<8x1xf32>
    %31 = arith.addf %27, %30 : vector<8x1xf32>
    %32 = math.rsqrt %31 : vector<8x1xf32>
    %33 = vector.broadcast %32 : vector<8x1xf32> to vector<8x64xf32>
    %34 = arith.mulf %29, %33 : vector<8x64xf32>
    %35 = vector.broadcast %1 : vector<1x64xf32> to vector<8x64xf32>
    %36 = arith.mulf %34, %35 : vector<8x64xf32>
    %37 = vector.broadcast %2 : vector<1x64xf32> to vector<8x64xf32>
    %38 = arith.addf %36, %37 : vector<8x64xf32>
    %39 = math.absf %38 : vector<8x64xf32>
    %cst_21 = arith.constant 0.000000e+00 : f32
    %40 = vector.broadcast %cst_21 : f32 to vector<8x64xf32>
    %41 = arith.subf %40, %39 : vector<8x64xf32>
    %42 = math.exp %41 : vector<8x64xf32>
    %cst_22 = arith.constant 0.000000e+00 : f32
    %43 = vector.broadcast %cst_22 : f32 to vector<8x64xf32>
    %44 = arith.cmpf oge, %38, %43 : vector<8x64xf32>
    %cst_23 = arith.constant 1.000000e+00 : f32
    %45 = vector.broadcast %cst_23 : f32 to vector<8x64xf32>
    %46 = arith.select %44, %42, %45 : vector<8x64xi1>, vector<8x64xf32>
    %47 = arith.mulf %46, %46 : vector<8x64xf32>
    %cst_24 = arith.constant 1.000000e+00 : f32
    %48 = vector.broadcast %cst_24 : f32 to vector<8x64xf32>
    %49 = arith.addf %48, %42 : vector<8x64xf32>
    %cst_25 = arith.constant 1.000000e+00 : f32
    %50 = vector.broadcast %cst_25 : f32 to vector<8x64xf32>
    %51 = arith.addf %50, %42 : vector<8x64xf32>
    %52 = arith.mulf %49, %51 : vector<8x64xf32>
    %53 = arith.addf %52, %47 : vector<8x64xf32>
    %54 = tpu.reciprocal %53 {approx = true} : vector<8x64xf32> -> vector<8x64xf32>
    %55 = arith.mulf %53, %54 : vector<8x64xf32>
    %cst_26 = arith.constant 2.000000e+00 : f32
    %56 = vector.broadcast %cst_26 : f32 to vector<8x64xf32>
    %57 = arith.subf %56, %55 : vector<8x64xf32>
    %58 = arith.mulf %54, %57 : vector<8x64xf32>
    %59 = arith.subf %52, %47 : vector<8x64xf32>
    %60 = arith.mulf %38, %59 : vector<8x64xf32>
    %61 = arith.mulf %60, %58 : vector<8x64xf32>
    %62 = arith.truncf %61 : vector<8x64xf32> to vector<8x64xbf16>
    %c0_27 = arith.constant 0 : index
    %c0_28 = arith.constant 0 : index
    %63 = vector.load %arg5[%c0_27, %c0_28] : memref<64x64xbf16, #tpu.memory_space<vmem>>, vector<64x64xbf16>
    %cst_29 = arith.constant dense<0.000000e+00> : vector<8x64xf32>
    %64 = tpu.matmul %62, %63, %cst_29 {dimension_numbers = #tpu.dot_dimension_numbers<[1], [0], [0], [1], [0, 0, 1, 1], [], []>} : vector<8x64xbf16>, vector<64x64xbf16>, vector<8x64xf32> -> vector<8x64xf32>
    %65 = vector.broadcast %3 : vector<1x64xf32> to vector<8x64xf32>
    %66 = arith.addf %64, %65 : vector<8x64xf32>
    %cst_30 = arith.constant dense<0.000000e+00> : vector<8xf32>
    %67 = vector.multi_reduction <add>, %66, %cst_30 [1] : vector<8x64xf32> to vector<8xf32>
    %68 = vector.shape_cast %67 : vector<8xf32> to vector<8x1xf32>
    %cst_31 = arith.constant 6.400000e+01 : f32
    %69 = vector.broadcast %cst_31 : f32 to vector<8x1xf32>
    %70 = arith.divf %68, %69 : vector<8x1xf32>
    %71 = arith.mulf %66, %66 : vector<8x64xf32>
    %cst_32 = arith.constant dense<0.000000e+00> : vector<8xf32>
    %72 = vector.multi_reduction <add>, %71, %cst_32 [1] : vector<8x64xf32> to vector<8xf32>
    %73 = vector.shape_cast %72 : vector<8xf32> to vector<8x1xf32>
    %cst_33 = arith.constant 6.400000e+01 : f32
    %74 = vector.broadcast %cst_33 : f32 to vector<8x1xf32>
    %75 = arith.divf %73, %74 : vector<8x1xf32>
    %76 = arith.mulf %70, %70 : vector<8x1xf32>
    %77 = arith.subf %75, %76 : vector<8x1xf32>
    %cst_34 = arith.constant 0.000000e+00 : f32
    %78 = vector.broadcast %cst_34 : f32 to vector<8x1xf32>
    %79 = arith.maximumf %77, %78 : vector<8x1xf32>
    %80 = vector.broadcast %70 : vector<8x1xf32> to vector<8x64xf32>
    %81 = arith.subf %66, %80 : vector<8x64xf32>
    %cst_35 = arith.constant 9.99999974E-6 : f32
    %82 = vector.broadcast %cst_35 : f32 to vector<8x1xf32>
    %83 = arith.addf %79, %82 : vector<8x1xf32>
    %84 = math.rsqrt %83 : vector<8x1xf32>
    %85 = vector.broadcast %84 : vector<8x1xf32> to vector<8x64xf32>
    %86 = arith.mulf %81, %85 : vector<8x64xf32>
    %87 = vector.broadcast %4 : vector<1x64xf32> to vector<8x64xf32>
    %88 = arith.mulf %86, %87 : vector<8x64xf32>
    %89 = vector.broadcast %5 : vector<1x64xf32> to vector<8x64xf32>
    %90 = arith.addf %88, %89 : vector<8x64xf32>
    %cst_36 = arith.constant dense<0xFF800000> : vector<8xf32>
    %91 = vector.multi_reduction <maximumf>, %90, %cst_36 [1] : vector<8x64xf32> to vector<8xf32>
    %92 = vector.shape_cast %91 : vector<8xf32> to vector<8x1xf32>
    %93 = vector.broadcast %92 : vector<8x1xf32> to vector<8x64xf32>
    %94 = arith.subf %90, %93 : vector<8x64xf32>
    %95 = math.exp %94 : vector<8x64xf32>
    %c0_37 = arith.constant 0 : index
    %c0_38 = arith.constant 0 : index
    %96 = vector.load %arg7[%c0_37, %c0_38] : memref<64x64xf32, #tpu.memory_space<vmem>>, vector<64x64xf32>
    %cst_39 = arith.constant dense<0.000000e+00> : vector<8x64xf32>
    %97 = tpu.matmul %95, %96, %cst_39 {dimension_numbers = #tpu.dot_dimension_numbers<[1], [0], [0], [1], [0, 0, 1, 1], [], []>} : vector<8x64xf32>, vector<64x64xf32>, vector<8x64xf32> -> vector<8x64xf32>
    %cst_40 = arith.constant 1.000000e-30 : f32
    %98 = vector.broadcast %cst_40 : f32 to vector<8x64xf32>
    %99 = arith.maximumf %97, %98 : vector<8x64xf32>
    %100 = tpu.reciprocal %99 {approx = true} : vector<8x64xf32> -> vector<8x64xf32>
    %101 = arith.mulf %99, %100 : vector<8x64xf32>
    %cst_41 = arith.constant 2.000000e+00 : f32
    %102 = vector.broadcast %cst_41 : f32 to vector<8x64xf32>
    %103 = arith.subf %102, %101 : vector<8x64xf32>
    %104 = arith.mulf %100, %103 : vector<8x64xf32>
    %105 = arith.mulf %95, %104 : vector<8x64xf32>
    %c0_42 = arith.constant 0 : index
    %c0_43 = arith.constant 0 : index
    %106 = vector.load %arg8[%c0_42, %c0_43] : memref<8x64xf32, #tpu.memory_space<vmem>>, vector<8x64xf32>
    tpu.vector_store %arg8[%c0_42, %c0_43], %105 {strides = array<i32>} : memref<8x64xf32, #tpu.memory_space<vmem>>, vector<8x64xf32>,
    return
  }
  func.func @transform_0(%arg0: i32) -> (i32, i32) {
    %c0_i32 = arith.constant 0 : i32
    %c0_i32_0 = arith.constant 0 : i32
    return %arg0, %c0_i32 : i32, i32
  }
  func.func @transform_1(%arg0: i32) -> (i32, i32) {
    %c0_i32 = arith.constant 0 : i32
    %c0_i32_0 = arith.constant 0 : i32
    return %arg0, %c0_i32 : i32, i32
  }
  func.func @transform_2(%arg0: i32) -> (i32, i32) {
    %c0_i32 = arith.constant 0 : i32
    %c0_i32_0 = arith.constant 0 : i32
    %c0_i32_1 = arith.constant 0 : i32
    return %c0_i32, %c0_i32_0 : i32, i32
  }
  func.func @transform_3(%arg0: i32) -> (i32, i32) {
    %c0_i32 = arith.constant 0 : i32
    %c0_i32_0 = arith.constant 0 : i32
    %c0_i32_1 = arith.constant 0 : i32
    return %c0_i32, %c0_i32_0 : i32, i32
  }
  func.func @transform_4(%arg0: i32) -> (i32, i32) {
    %c0_i32 = arith.constant 0 : i32
    %c0_i32_0 = arith.constant 0 : i32
    %c0_i32_1 = arith.constant 0 : i32
    return %c0_i32, %c0_i32_0 : i32, i32
  }
  func.func @transform_5(%arg0: i32) -> (i32, i32) {
    %c0_i32 = arith.constant 0 : i32
    %c0_i32_0 = arith.constant 0 : i32
    %c0_i32_1 = arith.constant 0 : i32
    return %c0_i32, %c0_i32_0 : i32, i32
  }
  func.func @transform_6(%arg0: i32) -> (i32, i32) {
    %c0_i32 = arith.constant 0 : i32
    %c0_i32_0 = arith.constant 0 : i32
    %c0_i32_1 = arith.constant 0 : i32
    return %c0_i32, %c0_i32_0 : i32, i32
  }
  func.func @transform_7(%arg0: i32) -> (i32, i32) {
    %c0_i32 = arith.constant 0 : i32
    %c0_i32_0 = arith.constant 0 : i32
    return %arg0, %c0_i32 : i32, i32
  }
}

</mosaic_0001>

<llo_original>
// kernel: tpu_custom_call.1
$region0: #{tpu_custom_call.1}
  #allocation0 [shape = 'u32[]', space=smem, size = 0x4, offset = 0x4, fixed_abs, tag = 'smem constant byte address 0x4 - core index']
  #allocation1 [shape = 'u32[144,128]{1,0:T(1,128)}', space=vmem, size = 0x12000, scoped, tag = 'internal scratch']
  %s0 = inlined_call_operand.hbm [shape: bf16[8,64], index: 0, kind: input, shape index: {}]
  %s1 = inlined_call_operand.hbm [shape: bf16[8,16], index: 1, kind: input, shape index: {}]
  %s2 = inlined_call_operand.hbm [shape: bf16[64,64], index: 2, kind: input, shape index: {}]
  %s3 = inlined_call_operand.vmem [shape: bf16[16,64], index: 3, kind: input, shape index: {}]
  %s4 = inlined_call_operand.hbm [shape: bf16[64,64], index: 4, kind: input, shape index: {}]
  %s5 = inlined_call_operand.vmem [shape: f32[8,64], index: 5, kind: input, shape index: {}]
  %s6 = inlined_call_operand.hbm [shape: f32[64,64], index: 6, kind: input, shape index: {}]
  %s7 = inlined_call_operand.hbm [shape: f32[8,64], index: 7, kind: output, shape index: {}]
  %s8 = sld [smem:[#allocation0]]
  $region58: #{tpu_custom_call.1} parent=0
    _
  %s10 = ssub.s32 1, %s8
  %s11 = scalar_select 0, %s10, %s8
  $region1: #{tpu_custom_call.1} parent=0
    #allocation2 [shape = 'u8[2048]{0}', space=vmem, size = 0x800, scoped, tag = 'input window, operand 0, single buffered']
    #allocation3 [shape = 's32[1]{0}', space=sflag, size = 0x4, scoped, tag = 'scoped memory for tpu_custom_call.1']
    #allocation4 [shape = 's32[1]{0}', space=sflag, size = 0x4, scoped, tag = 'scoped memory for tpu_custom_call.1']
    #allocation5 [shape = 'u8[2048]{0}', space=vmem, size = 0x800, scoped, tag = 'input window, operand 1, single buffered']
    #allocation6 [shape = 's32[1]{0}', space=sflag, size = 0x4, scoped, tag = 'scoped memory for tpu_custom_call.1']
    #allocation7 [shape = 'u8[16384]{0}', space=vmem, size = 0x4000, scoped, tag = 'input window, operand 2, single buffered']
    #allocation8 [shape = 'u8[16384]{0}', space=vmem, size = 0x4000, scoped, tag = 'input window, operand 4, single buffered']
    #allocation9 [shape = 's32[1]{0}', space=sflag, size = 0x4, scoped, tag = 'scoped memory for tpu_custom_call.1']
    #allocation10 [shape = 'u8[32768]{0}', space=vmem, size = 0x8000, scoped, tag = 'input window, operand 6, single buffered']
    #allocation11 [shape = 'u8[4096]{0}', space=vmem, size = 0x1000, scoped, tag = 'output window, operand 0, single buffered']
    %12 = vsyncpa [#allocation3], 0
    %13 = vsyncpa [#allocation6], 0
    %14 = vsyncpa [#allocation9], 0
    %15 = vsyncpa [#allocation4], 0
    // Predicated region
    $region2: #{tpu_custom_call.1} parent=1 // pred_check
      _
    $region3: #{tpu_custom_call.1} parent=1 // pred_check_branch
      %17 = sbr.rel (0) target = $region5
    $region4: #{tpu_custom_call.1} parent=1 // pred_region
      %s19 = ssub.s32 64, 64
      %20 = vsyncadd [#allocation3], %s19
      %s22 = sshll.u32 [#allocation2], 4
      %s23 = int_to_ptr.vmem [resolvable:$true] %s22
      %25 = dma.hbm_to_vmem [thread:$0]  %s0, 64, %s23, [#allocation3]
    $region5: #{tpu_custom_call.1} parent=1 // pred_fallthru
      _
    // Predicated region
    $region6: #{tpu_custom_call.1} parent=1 // pred_check
      _
    $region7: #{tpu_custom_call.1} parent=1 // pred_check_branch
      %27 = sbr.rel (0) target = $region9
    $region8: #{tpu_custom_call.1} parent=1 // pred_region
      %s29 = ssub.s32 64, 64
      %30 = vsyncadd [#allocation6], %s29
      %s32 = sshll.u32 [#allocation5], 4
      %s33 = int_to_ptr.vmem [resolvable:$true] %s32
      %35 = dma.hbm_to_vmem [thread:$0]  %s1, 64, %s33, [#allocation6]
    $region9: #{tpu_custom_call.1} parent=1 // pred_fallthru
      _
    // Predicated region
    $region10: #{tpu_custom_call.1} parent=1 // pred_check
      _
    $region11: #{tpu_custom_call.1} parent=1 // pred_check_branch
      %37 = sbr.rel (0) target = $region13
    $region12: #{tpu_custom_call.1} parent=1 // pred_region
      %s39 = ssub.s32 512, 512
      %40 = vsyncadd [#allocation6], %s39
      %s41 = sshll.u32 [#allocation7], 4
      %s42 = int_to_ptr.vmem [resolvable:$true] %s41
      %47 = dma.hbm_to_vmem [thread:$0]  %s2, 512, %s42, [#allocation6], 64, 64, 4
    $region13: #{tpu_custom_call.1} parent=1 // pred_fallthru
      _
    // Predicated region
    $region14: #{tpu_custom_call.1} parent=1 // pred_check
      _
    $region15: #{tpu_custom_call.1} parent=1 // pred_check_branch
      %49 = sbr.rel (0) target = $region17
    $region16: #{tpu_custom_call.1} parent=1 // pred_region
      _
    $region17: #{tpu_custom_call.1} parent=1 // pred_fallthru
      _
    // Predicated region
    $region18: #{tpu_custom_call.1} parent=1 // pred_check
      _
    $region19: #{tpu_custom_call.1} parent=1 // pred_check_branch
      %51 = sbr.rel (0) target = $region21
    $region20: #{tpu_custom_call.1} parent=1 // pred_region
      %s53 = ssub.s32 512, 512
      %54 = vsyncadd [#allocation9], %s53
      %s55 = sshll.u32 [#allocation8], 4
      %s56 = int_to_ptr.vmem [resolvable:$true] %s55
      %61 = dma.hbm_to_vmem [thread:$0]  %s4, 512, %s56, [#allocation9], 64, 64, 4
    $region21: #{tpu_custom_call.1} parent=1 // pred_fallthru
      _
    // Predicated region
    $region22: #{tpu_custom_call.1} parent=1 // pred_check
      _
    $region23: #{tpu_custom_call.1} parent=1 // pred_check_branch
      %63 = sbr.rel (0) target = $region25
    $region24: #{tpu_custom_call.1} parent=1 // pred_region
      _
    $region25: #{tpu_custom_call.1} parent=1 // pred_fallthru
      _
    // Predicated region
    $region26: #{tpu_custom_call.1} parent=1 // pred_check
      _
    $region27: #{tpu_custom_call.1} parent=1 // pred_check_branch
      %65 = sbr.rel (0) target = $region29
    $region28: #{tpu_custom_call.1} parent=1 // pred_region
      %s67 = ssub.s32 1024, 1024
      %68 = vsyncadd [#allocation9], %s67
      %s69 = sshll.u32 [#allocation10], 4
      %s70 = int_to_ptr.vmem [resolvable:$true] %s69
      %75 = dma.hbm_to_vmem [thread:$0]  %s6, 1024, %s70, [#allocation9], 128, 128, 8
    $region29: #{tpu_custom_call.1} parent=1 // pred_fallthru
      _
    // Predicated region
    $region30: #{tpu_custom_call.1} parent=1 // pred_check
      _
    $region31: #{tpu_custom_call.1} parent=1 // pred_check_branch
      %77 = sbr.rel (0) target = $region33
    $region32: #{tpu_custom_call.1} parent=1 // pred_region
      %78 = dma.done [#allocation3], 64
    $region33: #{tpu_custom_call.1} parent=1 // pred_fallthru
      _
    // Predicated region
    $region34: #{tpu_custom_call.1} parent=1 // pred_check
      _
    $region35: #{tpu_custom_call.1} parent=1 // pred_check_branch
      %80 = sbr.rel (0) target = $region37
    $region36: #{tpu_custom_call.1} parent=1 // pred_region
      %81 = dma.done [#allocation6], 64
    $region37: #{tpu_custom_call.1} parent=1 // pred_fallthru
      _
    // Predicated region
    $region38: #{tpu_custom_call.1} parent=1 // pred_check
      _
    $region39: #{tpu_custom_call.1} parent=1 // pred_check_branch
      %83 = sbr.rel (0) target = $region41
    $region40: #{tpu_custom_call.1} parent=1 // pred_region
      %84 = dma.done [#allocation6], 512
    $region41: #{tpu_custom_call.1} parent=1 // pred_fallthru
      _
    // Predicated region
    $region42: #{tpu_custom_call.1} parent=1 // pred_check
      _
    $region43: #{tpu_custom_call.1} parent=1 // pred_check_branch
      %86 = sbr.rel (0) target = $region45
    $region44: #{tpu_custom_call.1} parent=1 // pred_region
      %87 = dma.done [#allocation9], 512
    $region45: #{tpu_custom_call.1} parent=1 // pred_fallthru
      _
    // Predicated region
    $region46: #{tpu_custom_call.1} parent=1 // pred_check
      _
    $region47: #{tpu_custom_call.1} parent=1 // pred_check_branch
      %89 = sbr.rel (0) target = $region49
    $region48: #{tpu_custom_call.1} parent=1 // pred_region
      %90 = dma.done [#allocation9], 1024
    $region49: #{tpu_custom_call.1} parent=1 // pred_fallthru
      _
    %v92 = vld [vmem:[%s5] sm:$0x1]
    %v93 = vld [vmem:[%s5 + $0x1] sm:$0x1]
    %v94 = vld [vmem:[%s5 + $0x2] sm:$0x1]
    %v95 = vld [vmem:[%s5 + $0x3] sm:$0x1]
    %v96 = vld [vmem:[%s5 + $0x4] sm:$0x1]
    %v97 = vld [vmem:[%s5 + $0x5] sm:$0x1]
    %v98 = vld [vmem:[#allocation2] sm:$0xf]
    %v99 = vld [vmem:[#allocation7] sm:$0xf]
    %v100 = vld [vmem:[#allocation7 + $0x4] sm:$0xf]
    %v101 = vld [vmem:[#allocation7 + $0x8] sm:$0xf]
    %v102 = vld [vmem:[#allocation7 + $0xc] sm:$0xf]
    %v103 = vld [vmem:[#allocation7 + $0x10] sm:$0xf]
    %v104 = vld [vmem:[#allocation7 + $0x14] sm:$0xf]
    %v105 = vld [vmem:[#allocation7 + $0x18] sm:$0xf]
    %v106 = vld [vmem:[#allocation7 + $0x1c] sm:$0xf]
    %v107 = vld [vmem:[#allocation5] sm:$0xf]
    %v108 = vld [vmem:[%s3] sm:$0xf]
    %v109 = vld [vmem:[%s3 + $0x4] sm:$0xf]
    %v112 = vunpack.c.l.b16 %v108
    %v113 = vunpack.c.l.b16 %v109
    %v114 = vpack.c.b16 %v113, %v112
    %vm116 = vcmask 130048
    %v118 = vsel %vm116, %v107, 0
    %120 = vmatprep.subr.bf16.mxu0 0
    %121 = vmatpush1.bf16.msra.mxu0 %v114
    %122 = vmatprep.subr.bf16.mxu0 0
    %123 = vmatpush1.bf16.msra.mxu0 0
    %124 = vmatprep.subr.bf16.mxu0 0
    %125 = vmatpush1.bf16.msra.mxu0 0
    %126 = vmatprep.subr.bf16.mxu0 0
    %127 = vmatpush1.bf16.msra.mxu0 0
    %128 = vmatprep.subr.bf16.mxu0 0
    %129 = vmatpush1.bf16.msra.mxu0 0
    %130 = vmatprep.subr.bf16.mxu0 0
    %131 = vmatpush1.bf16.msra.mxu0 0
    %132 = vmatprep.subr.bf16.mxu0 0
    %133 = vmatpush1.bf16.msra.mxu0 0
    %134 = vmatprep.subr.bf16.mxu0 0
    %135 = vmatpush1.bf16.msra.mxu0 0
    %136 = vmatprep.subr.bf16.mxu0 0
    %137 = vmatpush1.bf16.msra.mxu0 0
    %138 = vmatprep.subr.bf16.mxu0 0
    %139 = vmatpush1.bf16.msra.mxu0 0
    %140 = vmatprep.subr.bf16.mxu0 0
    %141 = vmatpush1.bf16.msra.mxu0 0
    %142 = vmatprep.subr.bf16.mxu0 0
    %143 = vmatpush1.bf16.msra.mxu0 0
    %144 = vmatprep.subr.bf16.mxu0 0
    %145 = vmatpush1.bf16.msra.mxu0 0
    %146 = vmatprep.subr.bf16.mxu0 0
    %147 = vmatpush1.bf16.msra.mxu0 0
    %148 = vmatprep.subr.bf16.mxu0 0
    %149 = vmatpush1.bf16.msra.mxu0 0
    %150 = vmatprep.subr.bf16.mxu0 0
    %151 = vmatpush1.bf16.msra.mxu0 0
    %152 = vmatprep.mubr.bf16.mxu0 0
    %153 = vmatmul.mubr.bf16.gmra.mrb[0].mxu0 %v118
    %v154 = vpop.f32.mrb[0].mxu0
    %v155 = vadd.f32 0.0, %v154
    %v156 = vpop.f32.mrb[0].mxu0
    %v157 = vpop.f32.mrb[0].mxu0
    %v158 = vpop.f32.mrb[0].mxu0
    %159 = vdwg.mxu0
    %v168 = vunpack.c.l.b16 %v99
    %v169 = vunpack.c.l.b16 %v100
    %v170 = vunpack.c.l.b16 %v101
    %v171 = vunpack.c.l.b16 %v102
    %v172 = vunpack.c.l.b16 %v103
    %v173 = vunpack.c.l.b16 %v104
    %v174 = vunpack.c.l.b16 %v105
    %v175 = vunpack.c.l.b16 %v106
    %v176 = vpack.c.b16 %v169, %v168
    %v177 = vpack.c.b16 %v171, %v170
    %v178 = vpack.c.b16 %v173, %v172
    %v179 = vpack.c.b16 %v175, %v174
    %vm184 = vcmask 523264
    %v186 = vsel %vm184, %v98, 0
    %188 = vmatprep.subr.bf16.mxu0 0
    %189 = vmatpush1.bf16.msra.mxu0 %v176
    %190 = vmatprep.subr.bf16.mxu0 0
    %191 = vmatpush1.bf16.msra.mxu0 %v177
    %192 = vmatprep.subr.bf16.mxu0 0
    %193 = vmatpush1.bf16.msra.mxu0 %v178
    %194 = vmatprep.subr.bf16.mxu0 0
    %195 = vmatpush1.bf16.msra.mxu0 %v179
    %196 = vmatprep.subr.bf16.mxu0 0
    %197 = vmatpush1.bf16.msra.mxu0 0
    %198 = vmatprep.subr.bf16.mxu0 0
    %199 = vmatpush1.bf16.msra.mxu0 0
    %200 = vmatprep.subr.bf16.mxu0 0
    %201 = vmatpush1.bf16.msra.mxu0 0
    %202 = vmatprep.subr.bf16.mxu0 0
    %203 = vmatpush1.bf16.msra.mxu0 0
    %204 = vmatprep.subr.bf16.mxu0 0
    %205 = vmatpush1.bf16.msra.mxu0 0
    %206 = vmatprep.subr.bf16.mxu0 0
    %207 = vmatpush1.bf16.msra.mxu0 0
    %208 = vmatprep.subr.bf16.mxu0 0
    %209 = vmatpush1.bf16.msra.mxu0 0
    %210 = vmatprep.subr.bf16.mxu0 0
    %211 = vmatpush1.bf16.msra.mxu0 0
    %212 = vmatprep.subr.bf16.mxu0 0
    %213 = vmatpush1.bf16.msra.mxu0 0
    %214 = vmatprep.subr.bf16.mxu0 0
    %215 = vmatpush1.bf16.msra.mxu0 0
    %216 = vmatprep.subr.bf16.mxu0 0
    %217 = vmatpush1.bf16.msra.mxu0 0
    %218 = vmatprep.subr.bf16.mxu0 0
    %219 = vmatpush1.bf16.msra.mxu0 0
    %220 = vmatprep.mubr.bf16.mxu0 0
    %221 = vmatmul.mubr.bf16.gmra.mrb[0].mxu0 %v186
    %v222 = vpop.f32.mrb[0].mxu0
    %v223 = vadd.f32 %v155, %v222
    %v224 = vpop.f32.mrb[0].mxu0
    %v225 = vpop.f32.mrb[0].mxu0
    %v226 = vpop.f32.mrb[0].mxu0
    %227 = vdwg.mxu0
    %v228 = vlaneseq
    %v229 = vshrl.u32 %v228, 7
    %v230 = vsub.s32 0, %v229
    %v231 = vrot.slane %v92, %v230
    %v232 = vadd.f32 %v223, %v231
    %v233 = vsel %vm184, %v232, 0.0
    %234 = vadd.xlane.f32.xlu0 %v233
    %v235 = vpop.xlane.xlu0 %234
    %v236 = vrcp.pop 64.0
    %v237 = vmul.f32 %v235, %v236
    %v238 = vmul.f32 %v232, %v232
    %v239 = vsel %vm184, %v238, 0.0
    %240 = vadd.xlane.f32.xlu0 %v239
    %v241 = vpop.xlane.xlu0 %240
    %v242 = vmul.f32 %v241, %v236
    %v243 = vmul.f32 %v237, %v237
    %v244 = vsub.f32 %v242, %v243
    %v245 = vmax.f32 %v244, 0.0
    %v246 = vsub.f32 %v232, %v237
    %v247 = vadd.f32 %v245, 1e-05
    %v248 = vrsqrt.pop %v247
    %v249 = vmul.f32 %v246, %v248
    %v250 = vlaneseq
    %v251 = vshrl.u32 %v250, 7
    %v252 = vsub.s32 0, %v251
    %v253 = vrot.slane %v93, %v252
    %v254 = vmul.f32 %v249, %v253
    %v255 = vlaneseq
    %v256 = vshrl.u32 %v255, 7
    %v257 = vsub.s32 0, %v256
    %v258 = vrot.slane %v94, %v257
    %v259 = vadd.f32 %v254, %v258
    %v260 = vand.u32 2147483647, %v259
    %v261 = vsub.f32 0.0, %v260
    %v262 = vmul.f32 %v261, 1.442695
    %v263 = vpow.pop %v262
    %vm264 = vcmp.ge.f32.partialorder %v259, 0.0
    %v265 = vsel %vm264, %v263, 1.0
    %v266 = vmul.f32 %v265, %v265
    %v267 = vadd.f32 %v263, 1.0
    %v268 = vmul.f32 %v267, %v267
    %v269 = vadd.f32 %v268, %v266
    %v270 = vrcp.pop %v269
    %v271 = vmul.f32 %v269, %v270
    %v272 = vsub.f32 2.0, %v271
    %v273 = vmul.f32 %v270, %v272
    %v274 = vsub.f32 %v268, %v266
    %v275 = vmul.f32 %v259, %v274
    %v276 = vmul.f32 %v275, %v273
    %v277 = vpack.c.bf16 %v276, %v276
    %v278 = vld [vmem:[#allocation8] sm:$0xf]
    %v279 = vld [vmem:[#allocation8 + $0x4] sm:$0xf]
    %v280 = vld [vmem:[#allocation8 + $0x8] sm:$0xf]
    %v281 = vld [vmem:[#allocation8 + $0xc] sm:$0xf]
    %v282 = vld [vmem:[#allocation8 + $0x10] sm:$0xf]
    %v283 = vld [vmem:[#allocation8 + $0x14] sm:$0xf]
    %v284 = vld [vmem:[#allocation8 + $0x18] sm:$0xf]
    %v285 = vld [vmem:[#allocation8 + $0x1c] sm:$0xf]
    %v286 = vlaneseq
    %v287 = vshrl.u32 %v286, 7
    %v288 = vsub.s32 0, %v287
    %v289 = vrot.slane %v95, %v288
    %v298 = vunpack.c.l.b16 %v278
    %v299 = vunpack.c.l.b16 %v279
    %v300 = vunpack.c.l.b16 %v280
    %v301 = vunpack.c.l.b16 %v281
    %v302 = vunpack.c.l.b16 %v282
    %v303 = vunpack.c.l.b16 %v283
    %v304 = vunpack.c.l.b16 %v284
    %v305 = vunpack.c.l.b16 %v285
    %v306 = vpack.c.b16 %v299, %v298
    %v307 = vpack.c.b16 %v301, %v300
    %v308 = vpack.c.b16 %v303, %v302
    %v309 = vpack.c.b16 %v305, %v304
    %v315 = vsel %vm184, %v277, 0
    %317 = vmatprep.subr.bf16.mxu0 0
    %318 = vmatpush1.bf16.msra.mxu0 %v306
    %319 = vmatprep.subr.bf16.mxu0 0
    %320 = vmatpush1.bf16.msra.mxu0 %v307
    %321 = vmatprep.subr.bf16.mxu0 0
    %322 = vmatpush1.bf16.msra.mxu0 %v308
    %323 = vmatprep.subr.bf16.mxu0 0
    %324 = vmatpush1.bf16.msra.mxu0 %v309
    %325 = vmatprep.subr.bf16.mxu0 0
    %326 = vmatpush1.bf16.msra.mxu0 0
    %327 = vmatprep.subr.bf16.mxu0 0
    %328 = vmatpush1.bf16.msra.mxu0 0
    %329 = vmatprep.subr.bf16.mxu0 0
    %330 = vmatpush1.bf16.msra.mxu0 0
    %331 = vmatprep.subr.bf16.mxu0 0
    %332 = vmatpush1.bf16.msra.mxu0 0
    %333 = vmatprep.subr.bf16.mxu0 0
    %334 = vmatpush1.bf16.msra.mxu0 0
    %335 = vmatprep.subr.bf16.mxu0 0
    %336 = vmatpush1.bf16.msra.mxu0 0
    %337 = vmatprep.subr.bf16.mxu0 0
    %338 = vmatpush1.bf16.msra.mxu0 0
    %339 = vmatprep.subr.bf16.mxu0 0
    %340 = vmatpush1.bf16.msra.mxu0 0
    %341 = vmatprep.subr.bf16.mxu0 0
    %342 = vmatpush1.bf16.msra.mxu0 0
    %343 = vmatprep.subr.bf16.mxu0 0
    %344 = vmatpush1.bf16.msra.mxu0 0
    %345 = vmatprep.subr.bf16.mxu0 0
    %346 = vmatpush1.bf16.msra.mxu0 0
    %347 = vmatprep.subr.bf16.mxu0 0
    %348 = vmatpush1.bf16.msra.mxu0 0
    %349 = vmatprep.mubr.bf16.mxu0 0
    %350 = vmatmul.mubr.bf16.gmra.mrb[0].mxu0 %v315
    %v351 = vpop.f32.mrb[0].mxu0
    %v352 = vadd.f32 %v289, %v351
    %v353 = vpop.f32.mrb[0].mxu0
    %v354 = vpop.f32.mrb[0].mxu0
    %v355 = vpop.f32.mrb[0].mxu0
    %356 = vdwg.mxu0
    %v357 = vsel %vm184, %v352, 0.0
    %358 = vadd.xlane.f32.xlu0 %v357
    %v359 = vpop.xlane.xlu0 %358
    %v360 = vmul.f32 %v359, %v236
    %v361 = vmul.f32 %v352, %v352
    %v362 = vsel %vm184, %v361, 0.0
    %363 = vadd.xlane.f32.xlu0 %v362
    %v364 = vpop.xlane.xlu0 %363
    %v365 = vmul.f32 %v364, %v236
    %v366 = vmul.f32 %v360, %v360
    %v367 = vsub.f32 %v365, %v366
    %v368 = vmax.f32 %v367, 0.0
    %v369 = vsub.f32 %v352, %v360
    %v370 = vadd.f32 %v368, 1e-05
    %v371 = vrsqrt.pop %v370
    %v372 = vmul.f32 %v369, %v371
    %v373 = vlaneseq
    %v374 = vshrl.u32 %v373, 7
    %v375 = vsub.s32 0, %v374
    %v376 = vrot.slane %v96, %v375
    %v377 = vmul.f32 %v372, %v376
    %v378 = vlaneseq
    %v379 = vshrl.u32 %v378, 7
    %v380 = vsub.s32 0, %v379
    %v381 = vrot.slane %v97, %v380
    %v382 = vadd.f32 %v377, %v381
    %v383 = vsel %vm184, %v382, -inf
    %384 = vmax.xlane.f32.xlu0 %v383
    %v385 = vpop.xlane.xlu0 %384
    %v386 = vsub.f32 %v382, %v385
    %v387 = vmul.f32 %v386, 1.442695
    %v388 = vpow.pop %v387
    %v389 = vld [vmem:[#allocation10] sm:$0xff]
    %v390 = vld [vmem:[#allocation10 + $0x8] sm:$0xff]
    %v391 = vld [vmem:[#allocation10 + $0x10] sm:$0xff]
    %v392 = vld [vmem:[#allocation10 + $0x18] sm:$0xff]
    %v393 = vld [vmem:[#allocation10 + $0x20] sm:$0xff]
    %v394 = vld [vmem:[#allocation10 + $0x28] sm:$0xff]
    %v395 = vld [vmem:[#allocation10 + $0x30] sm:$0xff]
    %v396 = vld [vmem:[#allocation10 + $0x38] sm:$0xff]
    %v398 = vsel %vm184, %v388, 0
    %400 = vmatprep.subr.mxu0 0.0
    %401 = vmatpush1.msra.mxu0 %v389
    %402 = vmatprep.subr.mxu0 0.0
    %403 = vmatpush1.msra.mxu0 %v390
    %404 = vmatprep.subr.mxu0 0.0
    %405 = vmatpush1.msra.mxu0 %v391
    %406 = vmatprep.subr.mxu0 0.0
    %407 = vmatpush1.msra.mxu0 %v392
    %408 = vmatprep.subr.mxu0 0.0
    %409 = vmatpush1.msra.mxu0 %v393
    %410 = vmatprep.subr.mxu0 0.0
    %411 = vmatpush1.msra.mxu0 %v394
    %412 = vmatprep.subr.mxu0 0.0
    %413 = vmatpush1.msra.mxu0 %v395
    %414 = vmatprep.subr.mxu0 0.0
    %415 = vmatpush1.msra.mxu0 %v396
    %416 = vmatprep.subr.mxu0 0.0
    %417 = vmatpush1.msra.mxu0 0.0
    %418 = vmatprep.subr.mxu0 0.0
    %419 = vmatpush1.msra.mxu0 0.0
    %420 = vmatprep.subr.mxu0 0.0
    %421 = vmatpush1.msra.mxu0 0.0
    %422 = vmatprep.subr.mxu0 0.0
    %423 = vmatpush1.msra.mxu0 0.0
    %424 = vmatprep.subr.mxu0 0.0
    %425 = vmatpush1.msra.mxu0 0.0
    %426 = vmatprep.subr.mxu0 0.0
    %427 = vmatpush1.msra.mxu0 0.0
    %428 = vmatprep.subr.mxu0 0.0
    %429 = vmatpush1.msra.mxu0 0.0
    %430 = vmatprep.subr.mxu0 0.0
    %431 = vmatpush1.msra.mxu0 0.0
    %432 = vmatprep.subr.mxu0 0.0
    %433 = vmatpush1.msra.mxu0 0.0
    %434 = vmatprep.subr.mxu0 0.0
    %435 = vmatpush1.msra.mxu0 0.0
    %436 = vmatprep.subr.mxu0 0.0
    %437 = vmatpush1.msra.mxu0 0.0
    %438 = vmatprep.subr.mxu0 0.0
    %439 = vmatpush1.msra.mxu0 0.0
    %440 = vmatprep.subr.mxu0 0.0
    %441 = vmatpush1.msra.mxu0 0.0
    %442 = vmatprep.subr.mxu0 0.0
    %443 = vmatpush1.msra.mxu0 0.0
    %444 = vmatprep.subr.mxu0 0.0
    %445 = vmatpush1.msra.mxu0 0.0
    %446 = vmatprep.subr.mxu0 0.0
    %447 = vmatpush1.msra.mxu0 0.0
    %448 = vmatprep.subr.mxu0 0.0
    %449 = vmatpush1.msra.mxu0 0.0
    %450 = vmatprep.subr.mxu0 0.0
    %451 = vmatpush1.msra.mxu0 0.0
    %452 = vmatprep.subr.mxu0 0.0
    %453 = vmatpush1.msra.mxu0 0.0
    %454 = vmatprep.subr.mxu0 0.0
    %455 = vmatpush1.msra.mxu0 0.0
    %456 = vmatprep.subr.mxu0 0.0
    %457 = vmatpush1.msra.mxu0 0.0
    %458 = vmatprep.subr.mxu0 0.0
    %459 = vmatpush1.msra.mxu0 0.0
    %460 = vmatprep.subr.mxu0 0.0
    %461 = vmatpush1.msra.mxu0 0.0
    %462 = vmatprep.subr.mxu0 0.0
    %463 = vmatpush1.msra.mxu0 0.0
    %464 = vmatprep.mubr.f32.mxu0 0.0
    %465 = vmatmul.mubr.f32.gmra.mrb[0].mxu0 %v398
    %v466 = vpop.f32.mrb[0].mxu0
    %v467 = vadd.f32 0.0, %v466
    %v468 = vpop.f32.mrb[0].mxu0
    %469 = vdwg.mxu0
    %v470 = vmax.f32 %v467, 1e-30
    %v471 = vrcp.pop %v470
    %v472 = vmul.f32 %v470, %v471
    %v473 = vsub.f32 2.0, %v472
    %v474 = vmul.f32 %v471, %v473
    %v475 = vmul.f32 %v388, %v474
    %476 = vst.msk [vmem:[#allocation11] sm:$0xff] %vm184, %v475
    // Predicated region
    $region50: #{tpu_custom_call.1} parent=1 // pred_check
      _
    $region51: #{tpu_custom_call.1} parent=1 // pred_check_branch
      %478 = sbr.rel (0) target = $region53
    $region52: #{tpu_custom_call.1} parent=1 // pred_region
      %s480 = ssub.s32 128, 128
      %481 = vsyncadd [#allocation4], %s480
      %s483 = sshll.u32 [#allocation11], 4
      %s484 = int_to_ptr.vmem [resolvable:$true] %s483
      %486 = dma.vmem_to_hbm [thread:$0]  %s484, 128, %s7, [#allocation4]
    $region53: #{tpu_custom_call.1} parent=1 // pred_fallthru
      _
    // Predicated region
    $region54: #{tpu_custom_call.1} parent=1 // pred_check
      _
    $region55: #{tpu_custom_call.1} parent=1 // pred_check_branch
      %488 = sbr.rel (0) target = $region57
    $region56: #{tpu_custom_call.1} parent=1 // pred_region
      %489 = dma.done [#allocation4], 128
    $region57: #{tpu_custom_call.1} parent=1 // pred_fallthru
      _
    %490 = vsyncpa [#allocation3], 1
    %491 = vsyncpa [#allocation6], 1
    %492 = vsyncpa [#allocation9], 1
    %493 = vsyncpa [#allocation4], 1

</llo_original>
